<compile_context>
chip_gen: v7x
topology: tpu7x:2x2x1
jax: 0.10.0
libtpu: 0.0.40
codegen_flags: <defaults>
</compile_context>

<pallas_src>
import numpy as np
import jax
import jax.numpy as jnp
from jax.experimental import pallas as pl
from jax.experimental.pallas import tpu as pltpu


def _make_kernel(b_tile):
    def kernel(x_ref, w1_ref, b1_ref, wh_ref, bh_ref, ww_ref, bw_ref, o_ref):
        # x_ref block: (b_tile, C, H, W) -- native NCHW, W on lanes.
        w1 = w1_ref[...]          # (hid, C)   conv1 weight, BN folded
        b1 = b1_ref[...]          # (hid, 1)   conv1 bias,   BN folded
        wh = wh_ref[...]          # (C, hid)
        bh = bh_ref[...]          # (C, 1)
        ww = ww_ref[...]          # (C, hid)
        bw = bw_ref[...]          # (C, 1)

        for b in range(b_tile):   # small static unroll over images in the block
            x = x_ref[b]          # (C, H, W) in input dtype (never cast whole block)

            # Coordinate pooling; accumulate in f32 without materializing an
            # f32 copy that stays live (consumed immediately by the reduce).
            xh = jnp.mean(x, axis=2, dtype=jnp.float32)   # (C, H)  mean over W (lanes)
            xw = jnp.mean(x, axis=1, dtype=jnp.float32)   # (C, W)  mean over H (sublanes)

            # conv1 (1x1, BN folded) + ReLU.  Two small dots against the same
            # weight -- no sublane concat / relayout of the pooled tensors.
            yh = jnp.maximum(
                jnp.dot(w1, xh, preferred_element_type=jnp.float32) + b1, 0.0)  # (hid, H)
            yw = jnp.maximum(
                jnp.dot(w1, xw, preferred_element_type=jnp.float32) + b1, 0.0)  # (hid, W)

            # conv_h / conv_w (1x1) + sigmoid gates (f32 math on tiny tensors).
            ah = jax.nn.sigmoid(
                jnp.dot(wh, yh, preferred_element_type=jnp.float32) + bh)       # (C, H)
            aw = jax.nn.sigmoid(
                jnp.dot(ww, yw, preferred_element_type=jnp.float32) + bw)       # (C, W)

            # Gating epilogue in the input dtype: cast the tiny gates once,
            # then one broadcast multiply over the big (C, H, W) block.
            gd = x_ref.dtype
            gh = ah.astype(gd)[:, :, None]   # (C, H, 1) broadcast over W (lanes)
            gw = aw.astype(gd)[:, None, :]   # (C, 1, W) broadcast over H (sublanes)
            o_ref[b] = (x * gh * gw).astype(o_ref.dtype)

    return kernel


def coordinate_attention(x, params, eps=1e-5):
    """Pallas CoordinateAttention forward. x: (N,C,H,W) | (N,C,L) | (N,C)."""
    orig_shape = x.shape
    if x.ndim == 2:
        x4 = x[:, :, None, None]
    elif x.ndim == 3:
        x4 = x[:, :, :, None]
    else:
        x4 = x
    N, C, H, W = x4.shape

    # Fold eval-mode BatchNorm into conv1's weight and bias (wrapper-side, tiny).
    scale = params["bn_gamma"][:, 0] / jnp.sqrt(params["bn_var"][:, 0] + eps)
    shift = params["bn_beta"][:, 0] - params["bn_mean"][:, 0] * scale
    w1f = params["w1"] * scale[:, None]                       # (hid, C)
    b1f = (params["b1"][:, 0] * scale + shift)[:, None]       # (hid, 1)
    wh, bh = params["wh"], params["bh"]                       # (C, hid), (C, 1)
    ww, bw = params["ww"], params["bw"]                       # (C, hid), (C, 1)
    hid = w1f.shape[0]

    itemsize = x4.dtype.itemsize
    per_img = C * H * W * itemsize

    # VMEM budget: size the limit to the actual need, capped per generation
    # (never hand the kernel all of v7x's 64 MiB).
    try:
        vmem_cap = int(pltpu.get_tpu_info().vmem_capacity_bytes)
    except Exception:
        vmem_cap = 64 * 1024 * 1024
    cap = (vmem_cap * 3) // 4

    # Images per grid step: amortize per-step overhead, but keep the
    # double-buffered in+out blocks well inside the budget, and keep the grid
    # >= 2 steps when N >= 2 so both v7x TensorCores get work.
    block_budget = cap // 6
    min_grid = 2 if N >= 2 else 1
    b_tile = 1
    for cand in range(min(N, 16), 0, -1):
        if N % cand == 0 and N // cand >= min_grid and cand * per_img <= block_budget:
            b_tile = cand
            break

    weight_bytes = sum(int(np.prod(a.shape)) * a.dtype.itemsize
                       for a in (w1f, b1f, wh, bh, ww, bw))
    scratch_bytes = 8 * C * (H + W) * 4           # pooled / gate f32 intermediates
    need = 4 * b_tile * per_img + 2 * weight_bytes + scratch_bytes + (4 << 20)
    vmem_limit = int(min(cap, max(32 << 20, need)))

    grid = (N // b_tile,)

    def full(shape):
        return pl.BlockSpec(shape, lambda n, _s=shape: (0,) * len(_s))

    cost = pl.CostEstimate(
        flops=int(N * (4 * C * hid * (H + W)) + 4 * N * C * H * W),
        transcendentals=int(N * C * (H + W)),
        bytes_accessed=int(2 * N * per_img + weight_bytes),
    )

    out = pl.pallas_call(
        _make_kernel(b_tile),
        out_shape=jax.ShapeDtypeStruct((N, C, H, W), x4.dtype),
        grid_spec=pltpu.PrefetchScalarGridSpec(
            num_scalar_prefetch=0,
            grid=grid,
            in_specs=[
                pl.BlockSpec((b_tile, C, H, W), lambda n: (n, 0, 0, 0)),  # x (NCHW)
                full((hid, C)),    # conv1 weight (BN-folded)
                full((hid, 1)),    # conv1 bias   (BN-folded)
                full((C, hid)),    # conv_h weight
                full((C, 1)),      # conv_h bias
                full((C, hid)),    # conv_w weight
                full((C, 1)),      # conv_w bias
            ],
            out_specs=pl.BlockSpec((b_tile, C, H, W), lambda n: (n, 0, 0, 0)),
        ),
        compiler_params=pltpu.CompilerParams(
            dimension_semantics=("parallel",),
            vmem_limit_bytes=vmem_limit,
        ),
        cost_estimate=cost,
    )(x4, w1f, b1f, wh, bh, ww, bw)

    return out.reshape(orig_shape)


def _reference(x, params, eps=1e-5):
    """Pure-JAX reference mirroring the PyTorch forward (eval-mode BN)."""
    hp = jax.lax.Precision.HIGHEST
    H = x.shape[2]
    xh = jnp.mean(x, axis=3)                        # (N, C, H)
    xw = jnp.mean(x, axis=2)                        # (N, C, W)
    cat = jnp.concatenate([xh, xw], axis=2)         # (N, C, H+W)
    y = jnp.einsum("oc,ncl->nol", params["w1"], cat, precision=hp) + params["b1"][None]
    y = (y - params["bn_mean"][None]) / jnp.sqrt(params["bn_var"][None] + eps)
    y = y * params["bn_gamma"][None] + params["bn_beta"][None]
    y = jnp.maximum(y, 0.0)
    yh, yw = y[:, :, :H], y[:, :, H:]
    ah = jax.nn.sigmoid(
        jnp.einsum("co,nol->ncl", params["wh"], yh, precision=hp) + params["bh"][None])
    aw = jax.nn.sigmoid(
        jnp.einsum("co,nol->ncl", params["ww"], yw, precision=hp) + params["bw"][None])
    return x * ah[:, :, :, None] * aw[:, :, None, :]


def init_params(key, in_channels, reduction=32):
    hid = max(1, in_channels // reduction)
    ks = jax.random.split(key, 8)
    f32 = jnp.float32
    return {
        "w1": jax.random.normal(ks[0], (hid, in_channels), f32) * 0.5,
        "b1": jax.random.normal(ks[1], (hid, 1), f32) * 0.1,
        "wh": jax.random.normal(ks[2], (in_channels, hid), f32) * 0.5,
        "bh": jax.random.normal(ks[3], (in_channels, 1), f32) * 0.1,
        "ww": jax.random.normal(ks[4], (in_channels, hid), f32) * 0.5,
        "bw": jax.random.normal(ks[5], (in_channels, 1), f32) * 0.1,
        "bn_gamma": 1.0 + 0.1 * jax.random.normal(ks[6], (hid, 1), f32),
        "bn_beta": 0.1 * jax.random.normal(ks[7], (hid, 1), f32),
        "bn_mean": jnp.zeros((hid, 1), f32),
        "bn_var": jnp.ones((hid, 1), f32),
    }


if __name__ == "__main__":
    key = jax.random.PRNGKey(0)
    kx, kp = jax.random.split(key)

    N, C, H, W = 2, 4, 16, 16
    x = jax.random.normal(kx, (N, C, H, W), jnp.float32)
    params = init_params(kp, in_channels=C, reduction=32)

    out = coordinate_attention(x, params)
    out = jax.block_until_ready(out)

    ref = jax.block_until_ready(_reference(x, params))
    # Tolerance covers the (possible) bf16 MXU pass inside the kernel vs the
    # HIGHEST-precision reference; real bugs produce O(0.1+) errors.
    np.testing.assert_allclose(np.asarray(out), np.asarray(ref), rtol=1e-2, atol=2e-3)

    print("KERNEL_OK")
</pallas_src>

<mosaic_0001>
module attributes {stable_mosaic.version = 11 : i64} {
  func.func @kernel(%arg0: i32, %arg1: memref<1x4x16x16xf32, #tpu.memory_space<vmem>>, %arg2: memref<1x4xf32, #tpu.memory_space<vmem>>, %arg3: memref<1x1xf32, #tpu.memory_space<vmem>>, %arg4: memref<4x1xf32, #tpu.memory_space<vmem>>, %arg5: memref<4x1xf32, #tpu.memory_space<vmem>>, %arg6: memref<4x1xf32, #tpu.memory_space<vmem>>, %arg7: memref<4x1xf32, #tpu.memory_space<vmem>>, %arg8: memref<1x4x16x16xf32, #tpu.memory_space<vmem>>) attributes {dimension_semantics = [#tpu.dimension_semantics<parallel>], iteration_bounds = array<i64: 2>, scalar_prefetch = 0 : i64, scratch_operands = 0 : i64, tpu.core_type = #tpu.core_type<tc>, window_params = [{transform_indices = @transform_0, window_bounds = array<i64: 1, 4, 16, 16>}, {pipeline_mode = #tpu.pipeline_mode<synchronous>, transform_indices = @transform_1, window_bounds = array<i64: 1, 4>}, {pipeline_mode = #tpu.pipeline_mode<synchronous>, transform_indices = @transform_2, window_bounds = array<i64: 1, 1>}, {pipeline_mode = #tpu.pipeline_mode<synchronous>, transform_indices = @transform_3, window_bounds = array<i64: 4, 1>}, {pipeline_mode = #tpu.pipeline_mode<synchronous>, transform_indices = @transform_4, window_bounds = array<i64: 4, 1>}, {pipeline_mode = #tpu.pipeline_mode<synchronous>, transform_indices = @transform_5, window_bounds = array<i64: 4, 1>}, {pipeline_mode = #tpu.pipeline_mode<synchronous>, transform_indices = @transform_6, window_bounds = array<i64: 4, 1>}, {transform_indices = @transform_7, window_bounds = array<i64: 1, 4, 16, 16>}]} {
    %c0 = arith.constant 0 : index
    %c0_0 = arith.constant 0 : index
    %0 = vector.load %arg2[%c0, %c0_0] : memref<1x4xf32, #tpu.memory_space<vmem>>, vector<1x4xf32>
    %c0_1 = arith.constant 0 : index
    %c0_2 = arith.constant 0 : index
    %1 = vector.load %arg3[%c0_1, %c0_2] : memref<1x1xf32, #tpu.memory_space<vmem>>, vector<1x1xf32>
    %c0_3 = arith.constant 0 : index
    %c0_4 = arith.constant 0 : index
    %2 = vector.load %arg4[%c0_3, %c0_4] : memref<4x1xf32, #tpu.memory_space<vmem>>, vector<4x1xf32>
    %c0_5 = arith.constant 0 : index
    %c0_6 = arith.constant 0 : index
    %3 = vector.load %arg5[%c0_5, %c0_6] : memref<4x1xf32, #tpu.memory_space<vmem>>, vector<4x1xf32>
    %c0_7 = arith.constant 0 : index
    %c0_8 = arith.constant 0 : index
    %4 = vector.load %arg6[%c0_7, %c0_8] : memref<4x1xf32, #tpu.memory_space<vmem>>, vector<4x1xf32>
    %c0_9 = arith.constant 0 : index
    %c0_10 = arith.constant 0 : index
    %5 = vector.load %arg7[%c0_9, %c0_10] : memref<4x1xf32, #tpu.memory_space<vmem>>, vector<4x1xf32>
    %c0_11 = arith.constant 0 : index
    %c0_12 = arith.constant 0 : index
    %c0_13 = arith.constant 0 : index
    %c0_14 = arith.constant 0 : index
    %6 = vector.load %arg1[%c0_11, %c0_12, %c0_13, %c0_14] : memref<1x4x16x16xf32, #tpu.memory_space<vmem>>, vector<1x4x16x16xf32>
    %7 = vector.shape_cast %6 : vector<1x4x16x16xf32> to vector<4x16x16xf32>
    %cst = arith.constant dense<0.000000e+00> : vector<4x16xf32>
    %8 = vector.multi_reduction <add>, %7, %cst [2] : vector<4x16x16xf32> to vector<4x16xf32>
    %cst_15 = arith.constant 1.600000e+01 : f32
    %9 = vector.broadcast %cst_15 : f32 to vector<4x16xf32>
    %10 = arith.divf %8, %9 : vector<4x16xf32>
    %cst_16 = arith.constant dense<0.000000e+00> : vector<4x16xf32>
    %11 = vector.multi_reduction <add>, %7, %cst_16 [1] : vector<4x16x16xf32> to vector<4x16xf32>
    %cst_17 = arith.constant 1.600000e+01 : f32
    %12 = vector.broadcast %cst_17 : f32 to vector<4x16xf32>
    %13 = arith.divf %11, %12 : vector<4x16xf32>
    %cst_18 = arith.constant dense<0.000000e+00> : vector<1x16xf32>
    %14 = tpu.matmul %0, %10, %cst_18 {dimension_numbers = #tpu.dot_dimension_numbers<[1], [0], [0], [1], [0, 0, 1, 1], [], []>} : vector<1x4xf32>, vector<4x16xf32>, vector<1x16xf32> -> vector<1x16xf32>
    %15 = vector.broadcast %1 : vector<1x1xf32> to vector<1x16xf32>
    %16 = arith.addf %14, %15 : vector<1x16xf32>
    %cst_19 = arith.constant 0.000000e+00 : f32
    %17 = vector.broadcast %cst_19 : f32 to vector<1x16xf32>
    %18 = arith.maximumf %16, %17 : vector<1x16xf32>
    %cst_20 = arith.constant dense<0.000000e+00> : vector<1x16xf32>
    %19 = tpu.matmul %0, %13, %cst_20 {dimension_numbers = #tpu.dot_dimension_numbers<[1], [0], [0], [1], [0, 0, 1, 1], [], []>} : vector<1x4xf32>, vector<4x16xf32>, vector<1x16xf32> -> vector<1x16xf32>
    %20 = vector.broadcast %1 : vector<1x1xf32> to vector<1x16xf32>
    %21 = arith.addf %19, %20 : vector<1x16xf32>
    %cst_21 = arith.constant 0.000000e+00 : f32
    %22 = vector.broadcast %cst_21 : f32 to vector<1x16xf32>
    %23 = arith.maximumf %21, %22 : vector<1x16xf32>
    %cst_22 = arith.constant dense<0.000000e+00> : vector<4x16xf32>
    %24 = tpu.matmul %2, %18, %cst_22 {dimension_numbers = #tpu.dot_dimension_numbers<[1], [0], [0], [1], [0, 0, 1, 1], [], []>} : vector<4x1xf32>, vector<1x16xf32>, vector<4x16xf32> -> vector<4x16xf32>
    %25 = vector.broadcast %3 : vector<4x1xf32> to vector<4x16xf32>
    %26 = arith.addf %24, %25 : vector<4x16xf32>
    %27 = arith.negf %26 : vector<4x16xf32>
    %28 = math.exp %27 : vector<4x16xf32>
    %cst_23 = arith.constant 1.000000e+00 : f32
    %29 = vector.broadcast %cst_23 : f32 to vector<4x16xf32>
    %30 = arith.addf %29, %28 : vector<4x16xf32>
    %31 = arith.divf %29, %30 : vector<4x16xf32>
    %cst_24 = arith.constant dense<0.000000e+00> : vector<4x16xf32>
    %32 = tpu.matmul %4, %23, %cst_24 {dimension_numbers = #tpu.dot_dimension_numbers<[1], [0], [0], [1], [0, 0, 1, 1], [], []>} : vector<4x1xf32>, vector<1x16xf32>, vector<4x16xf32> -> vector<4x16xf32>
    %33 = vector.broadcast %5 : vector<4x1xf32> to vector<4x16xf32>
    %34 = arith.addf %32, %33 : vector<4x16xf32>
    %35 = arith.negf %34 : vector<4x16xf32>
    %36 = math.exp %35 : vector<4x16xf32>
    %cst_25 = arith.constant 1.000000e+00 : f32
    %37 = vector.broadcast %cst_25 : f32 to vector<4x16xf32>
    %38 = arith.addf %37, %36 : vector<4x16xf32>
    %39 = arith.divf %37, %38 : vector<4x16xf32>
    %40 = vector.shape_cast %31 : vector<4x16xf32> to vector<4x16x1xf32>
    %41 = vector.shape_cast %39 : vector<4x16xf32> to vector<4x1x16xf32>
    %42 = vector.broadcast %40 : vector<4x16x1xf32> to vector<4x16x16xf32>
    %43 = arith.mulf %7, %42 : vector<4x16x16xf32>
    %44 = vector.broadcast %41 : vector<4x1x16xf32> to vector<4x16x16xf32>
    %45 = arith.mulf %43, %44 : vector<4x16x16xf32>
    %c0_26 = arith.constant 0 : index
    %c0_27 = arith.constant 0 : index
    %c0_28 = arith.constant 0 : index
    %c0_29 = arith.constant 0 : index
    %46 = vector.load %arg8[%c0_26, %c0_27, %c0_28, %c0_29] : memref<1x4x16x16xf32, #tpu.memory_space<vmem>>, vector<1x4x16x16xf32>
    %47 = vector.shape_cast %46 : vector<1x4x16x16xf32> to vector<4x16x16xf32>
    %48 = vector.shape_cast %45 : vector<4x16x16xf32> to vector<1x4x16x16xf32>
    tpu.vector_store %arg8[%c0_26, %c0_27, %c0_28, %c0_29], %48 {strides = array<i32>} : memref<1x4x16x16xf32, #tpu.memory_space<vmem>>, vector<1x4x16x16xf32>,
    return
  }
  func.func @transform_0(%arg0: i32) -> (i32, i32, i32, i32) {
    %c0_i32 = arith.constant 0 : i32
    %c0_i32_0 = arith.constant 0 : i32
    %c0_i32_1 = arith.constant 0 : i32
    %c0_i32_2 = arith.constant 0 : i32
    return %arg0, %c0_i32, %c0_i32_0, %c0_i32_1 : i32, i32, i32, i32
  }
  func.func @transform_1(%arg0: i32) -> (i32, i32) {
    %c0_i32 = arith.constant 0 : i32
    %c0_i32_0 = arith.constant 0 : i32
    %c0_i32_1 = arith.constant 0 : i32
    return %c0_i32, %c0_i32_0 : i32, i32
  }
  func.func @transform_2(%arg0: i32) -> (i32, i32) {
    %c0_i32 = arith.constant 0 : i32
    %c0_i32_0 = arith.constant 0 : i32
    %c0_i32_1 = arith.constant 0 : i32
    return %c0_i32, %c0_i32_0 : i32, i32
  }
  func.func @transform_3(%arg0: i32) -> (i32, i32) {
    %c0_i32 = arith.constant 0 : i32
    %c0_i32_0 = arith.constant 0 : i32
    %c0_i32_1 = arith.constant 0 : i32
    return %c0_i32, %c0_i32_0 : i32, i32
  }
  func.func @transform_4(%arg0: i32) -> (i32, i32) {
    %c0_i32 = arith.constant 0 : i32
    %c0_i32_0 = arith.constant 0 : i32
    %c0_i32_1 = arith.constant 0 : i32
    return %c0_i32, %c0_i32_0 : i32, i32
  }
  func.func @transform_5(%arg0: i32) -> (i32, i32) {
    %c0_i32 = arith.constant 0 : i32
    %c0_i32_0 = arith.constant 0 : i32
    %c0_i32_1 = arith.constant 0 : i32
    return %c0_i32, %c0_i32_0 : i32, i32
  }
  func.func @transform_6(%arg0: i32) -> (i32, i32) {
    %c0_i32 = arith.constant 0 : i32
    %c0_i32_0 = arith.constant 0 : i32
    %c0_i32_1 = arith.constant 0 : i32
    return %c0_i32, %c0_i32_0 : i32, i32
  }
  func.func @transform_7(%arg0: i32) -> (i32, i32, i32, i32) {
    %c0_i32 = arith.constant 0 : i32
    %c0_i32_0 = arith.constant 0 : i32
    %c0_i32_1 = arith.constant 0 : i32
    %c0_i32_2 = arith.constant 0 : i32
    return %arg0, %c0_i32, %c0_i32_0, %c0_i32_1 : i32, i32, i32, i32
  }
}

</mosaic_0001>

<llo_original>
// kernel: tpu_custom_call.1
$region0: #{tpu_custom_call.1}
  #allocation0 [shape = 'u32[]', space=smem, size = 0x4, offset = 0x4, fixed_abs, tag = 'smem constant byte address 0x4 - core index']
  #allocation1 [shape = 'u32[144,128]{1,0:T(1,128)}', space=vmem, size = 0x12000, scoped, tag = 'internal scratch']
  #allocation2 [shape = 'f32[1,1]{1,0:T(1,128)S(1)}', space=vmem, size = 0x200, scoped, tag = 'scoped memory for tpu_custom_call.1']
  %s0 = inlined_call_operand.hbm [shape: f32[2,4,16,16], index: 0, kind: input, shape index: {}]
  %s1 = inlined_call_operand.vmem [shape: f32[1,4], index: 1, kind: input, shape index: {}]
  %s2 = inlined_call_operand.<no memory space> [shape: f32[1,1], index: 2, kind: input, shape index: {}]
  %s3 = inlined_call_operand.vmem [shape: f32[4,1], index: 3, kind: input, shape index: {}]
  %s4 = inlined_call_operand.vmem [shape: f32[4,1], index: 4, kind: input, shape index: {}]
  %s5 = inlined_call_operand.vmem [shape: f32[4,1], index: 5, kind: input, shape index: {}]
  %s6 = inlined_call_operand.vmem [shape: f32[4,1], index: 6, kind: input, shape index: {}]
  %s7 = inlined_call_operand.hbm [shape: f32[2,4,16,16], index: 7, kind: output, shape index: {}]
  %s8 = sld [smem:[#allocation0]]
  $region65: #{tpu_custom_call.1} parent=0
    _
  %s10 = ssub.s32 1, %s8
  %s11 = scalar_select 0, %s10, %s8
  %v12 = vstv %s2
  %13 = vst [vmem:[#allocation2] sm:$0x1] %v12
  $region1: #{tpu_custom_call.1} parent=0
    #allocation3 [shape = 'u8[65536]{0}', space=vmem, size = 0x10000, scoped, tag = 'input window, operand 0']
    #allocation4 [shape = 's32[2]{0}', space=sflag, size = 0x8, scoped, tag = 'scoped memory for tpu_custom_call.1']
    #allocation5 [shape = 's32[2]{0}', space=sflag, size = 0x8, scoped, tag = 'scoped memory for tpu_custom_call.1']
    #allocation6 [shape = 'u8[65536]{0}', space=vmem, size = 0x10000, scoped, tag = 'output window, operand 0']
    %14 = vsyncpa [#allocation4], 0
    %s15 = scalar_lea.sflag [#allocation4], 1
    %16 = vsyncpa %s15, 0
    %17 = vsyncpa [#allocation5], 0
    %s18 = scalar_lea.sflag [#allocation5], 1
    %19 = vsyncpa %s18, 0
    loop: start=0, step=1, limit=4
    $region2: #{tpu_custom_call.1} parent=1 // loop_pre_header
      _
    $region3: #{tpu_custom_call.1} parent=1 // loop_header
      %s21 = sphi 0, %s25
      %p22 = scmp.ge.s32.totalorder %s21, 4
      %s31 = sphi 0, %s33
      %s34 = sphi 0, %s31
      %s35 = sphi 0, %s34
      %s51 = sphi 0, %s35
      %s55 = sphi 0, %s55
      %s57 = sphi 0, %s55
      %s58 = sphi 0, %s57
      %s72 = sphi 0, %s58
      %s76 = sphi 0, %s76
      %s78 = sphi 0, %s76
      %s79 = sphi 0, %s78
      %s93 = sphi 0, %s79
      %s97 = sphi 0, %s97
      %s99 = sphi 0, %s97
      %s100 = sphi 0, %s99
      %s114 = sphi 0, %s100
      %s118 = sphi 0, %s118
      %s120 = sphi 0, %s118
      %s121 = sphi 0, %s120
      %s135 = sphi 0, %s121
      %s139 = sphi 0, %s139
      %s141 = sphi 0, %s139
      %s142 = sphi 0, %s141
      %s156 = sphi 0, %s142
      %s160 = sphi 0, %s160
      %s162 = sphi 0, %s160
      %s163 = sphi 0, %s162
      %s177 = sphi 0, %s163
      %s183 = sphi 0, %s185
      %s186 = sphi 0, %s183
      %s187 = sphi 0, %s186
      %s203 = sphi 0, %s187
    $region4: #{tpu_custom_call.1} parent=1 // loop_header_branch
      %24 = sbr.rel (%p22) target = $region8
    $region5: #{tpu_custom_call.1} parent=1 // loop_body
      %s26 = ssub.s32 %s21, 1
      %s27 = ssub.s32 %s21, 2
      %s28 = sadd.s32 %s21, 1
      %s29 = ssub.s32 %s21, %s28
      %p30 = scmp.eq.s32.totalorder %s29, 0
      %s32 = sadd.s32 %s31, 1
      %s33 = scalar_select %p30, %s31, %s32
      %p36 = pneg %p30
      %p37 = scmp.eq.s32.totalorder %s21, 1
      %p38 = por %p36, %p37
      %p39 = scmp.ne.s32.totalorder %s31, %s34
      %p40 = scmp.eq.s32.totalorder %s21, 0
      %p41 = por %p39, %p40
      %p42 = scmp.ne.s32.totalorder %s31, %s34
      %p43 = scmp.eq.s32.totalorder %s26, 1
      %p44 = por %p42, %p43
      %p45 = scmp.ne.s32.totalorder %s34, %s35
      %p46 = scmp.eq.s32.totalorder %s26, 0
      %p47 = por %p45, %p46
      %p48 = scmp.ne.s32.totalorder %s34, %s35
      %p49 = scmp.eq.s32.totalorder %s27, 1
      %p50 = por %p48, %p49
      %p52 = scmp.ne.s32.totalorder %s35, %s51
      %p53 = scmp.eq.s32.totalorder %s27, 0
      %p54 = por %p52, %p53
      %s56 = sadd.s32 %s55, 1
      %p59 = scmp.eq.s32.totalorder %s21, 1
      %p60 = scmp.ne.s32.totalorder %s55, %s57
      %p61 = scmp.eq.s32.totalorder %s21, 0
      %p62 = por %p60, %p61
      %p63 = scmp.ne.s32.totalorder %s55, %s57
      %p64 = scmp.eq.s32.totalorder %s26, 1
      %p65 = por %p63, %p64
      %p66 = scmp.ne.s32.totalorder %s57, %s58
      %p67 = scmp.eq.s32.totalorder %s26, 0
      %p68 = por %p66, %p67
      %p69 = scmp.ne.s32.totalorder %s57, %s58
      %p70 = scmp.eq.s32.totalorder %s27, 1
      %p71 = por %p69, %p70
      %p73 = scmp.ne.s32.totalorder %s58, %s72
      %p74 = scmp.eq.s32.totalorder %s27, 0
      %p75 = por %p73, %p74
      %s77 = sadd.s32 %s76, 1
      %p80 = scmp.eq.s32.totalorder %s21, 1
      %p81 = scmp.ne.s32.totalorder %s76, %s78
      %p82 = scmp.eq.s32.totalorder %s21, 0
      %p83 = por %p81, %p82
      %p84 = scmp.ne.s32.totalorder %s76, %s78
      %p85 = scmp.eq.s32.totalorder %s26, 1
      %p86 = por %p84, %p85
      %p87 = scmp.ne.s32.totalorder %s78, %s79
      %p88 = scmp.eq.s32.totalorder %s26, 0
      %p89 = por %p87, %p88
      %p90 = scmp.ne.s32.totalorder %s78, %s79
      %p91 = scmp.eq.s32.totalorder %s27, 1
      %p92 = por %p90, %p91
      %p94 = scmp.ne.s32.totalorder %s79, %s93
      %p95 = scmp.eq.s32.totalorder %s27, 0
      %p96 = por %p94, %p95
      %s98 = sadd.s32 %s97, 1
      %p101 = scmp.eq.s32.totalorder %s21, 1
      %p102 = scmp.ne.s32.totalorder %s97, %s99
      %p103 = scmp.eq.s32.totalorder %s21, 0
      %p104 = por %p102, %p103
      %p105 = scmp.ne.s32.totalorder %s97, %s99
      %p106 = scmp.eq.s32.totalorder %s26, 1
      %p107 = por %p105, %p106
      %p108 = scmp.ne.s32.totalorder %s99, %s100
      %p109 = scmp.eq.s32.totalorder %s26, 0
      %p110 = por %p108, %p109
      %p111 = scmp.ne.s32.totalorder %s99, %s100
      %p112 = scmp.eq.s32.totalorder %s27, 1
      %p113 = por %p111, %p112
      %p115 = scmp.ne.s32.totalorder %s100, %s114
      %p116 = scmp.eq.s32.totalorder %s27, 0
      %p117 = por %p115, %p116
      %s119 = sadd.s32 %s118, 1
      %p122 = scmp.eq.s32.totalorder %s21, 1
      %p123 = scmp.ne.s32.totalorder %s118, %s120
      %p124 = scmp.eq.s32.totalorder %s21, 0
      %p125 = por %p123, %p124
      %p126 = scmp.ne.s32.totalorder %s118, %s120
      %p127 = scmp.eq.s32.totalorder %s26, 1
      %p128 = por %p126, %p127
      %p129 = scmp.ne.s32.totalorder %s120, %s121
      %p130 = scmp.eq.s32.totalorder %s26, 0
      %p131 = por %p129, %p130
      %p132 = scmp.ne.s32.totalorder %s120, %s121
      %p133 = scmp.eq.s32.totalorder %s27, 1
      %p134 = por %p132, %p133
      %p136 = scmp.ne.s32.totalorder %s121, %s135
      %p137 = scmp.eq.s32.totalorder %s27, 0
      %p138 = por %p136, %p137
      %s140 = sadd.s32 %s139, 1
      %p143 = scmp.eq.s32.totalorder %s21, 1
      %p144 = scmp.ne.s32.totalorder %s139, %s141
      %p145 = scmp.eq.s32.totalorder %s21, 0
      %p146 = por %p144, %p145
      %p147 = scmp.ne.s32.totalorder %s139, %s141
      %p148 = scmp.eq.s32.totalorder %s26, 1
      %p149 = por %p147, %p148
      %p150 = scmp.ne.s32.totalorder %s141, %s142
      %p151 = scmp.eq.s32.totalorder %s26, 0
      %p152 = por %p150, %p151
      %p153 = scmp.ne.s32.totalorder %s141, %s142
      %p154 = scmp.eq.s32.totalorder %s27, 1
      %p155 = por %p153, %p154
      %p157 = scmp.ne.s32.totalorder %s142, %s156
      %p158 = scmp.eq.s32.totalorder %s27, 0
      %p159 = por %p157, %p158
      %s161 = sadd.s32 %s160, 1
      %p164 = scmp.eq.s32.totalorder %s21, 1
      %p165 = scmp.ne.s32.totalorder %s160, %s162
      %p166 = scmp.eq.s32.totalorder %s21, 0
      %p167 = por %p165, %p166
      %p168 = scmp.ne.s32.totalorder %s160, %s162
      %p169 = scmp.eq.s32.totalorder %s26, 1
      %p170 = por %p168, %p169
      %p171 = scmp.ne.s32.totalorder %s162, %s163
      %p172 = scmp.eq.s32.totalorder %s26, 0
      %p173 = por %p171, %p172
      %p174 = scmp.ne.s32.totalorder %s162, %s163
      %p175 = scmp.eq.s32.totalorder %s27, 1
      %p176 = por %p174, %p175
      %p178 = scmp.ne.s32.totalorder %s163, %s177
      %p179 = scmp.eq.s32.totalorder %s27, 0
      %p180 = por %p178, %p179
      %s181 = ssub.s32 %s21, %s28
      %p182 = scmp.eq.s32.totalorder %s181, 0
      %s184 = sadd.s32 %s183, 1
      %s185 = scalar_select %p182, %s183, %s184
      %p188 = pneg %p182
      %p189 = scmp.eq.s32.totalorder %s21, 1
      %p190 = por %p188, %p189
      %p191 = scmp.ne.s32.totalorder %s183, %s186
      %p192 = scmp.eq.s32.totalorder %s21, 0
      %p193 = por %p191, %p192
      %p194 = scmp.ne.s32.totalorder %s183, %s186
      %p195 = scmp.eq.s32.totalorder %s26, 1
      %p196 = por %p194, %p195
      %p197 = scmp.ne.s32.totalorder %s186, %s187
      %p198 = scmp.eq.s32.totalorder %s26, 0
      %p199 = por %p197, %p198
      %p200 = scmp.ne.s32.totalorder %s186, %s187
      %p201 = scmp.eq.s32.totalorder %s27, 1
      %p202 = por %p200, %p201
      %p204 = scmp.ne.s32.totalorder %s187, %s203
      %p205 = scmp.eq.s32.totalorder %s27, 0
      %p206 = por %p204, %p205
      %p207 = scmp.le.s32.totalorder 1, %s21
      %p208 = scmp.lt.s32.totalorder %s21, 3
      %p209 = pnand %p207, %p208
      %p210 = pneg %p209
      // Predicated region
      $region9: #{tpu_custom_call.1} parent=5 // pred_check
        _
      $region10: #{tpu_custom_call.1} parent=5 // pred_check_branch
        %212 = sbr.rel (%p209) target = $region12
      $region11: #{tpu_custom_call.1} parent=5 // pred_region
        %s213 = ssub.s32 %s21, 1
        // Predicated region
        $region13: #{tpu_custom_call.1} parent=11 // pred_check
          %p214 = pneg %p68
        $region14: #{tpu_custom_call.1} parent=11 // pred_check_branch
          %216 = sbr.rel (%p214) target = $region16
        $region15: #{tpu_custom_call.1} parent=11 // pred_region
          _
        $region16: #{tpu_custom_call.1} parent=11 // pred_fallthru
          _
        // Predicated region
        $region17: #{tpu_custom_call.1} parent=11 // pred_check
          %p217 = pneg %p89
        $region18: #{tpu_custom_call.1} parent=11 // pred_check_branch
          %219 = sbr.rel (%p217) target = $region20
        $region19: #{tpu_custom_call.1} parent=11 // pred_region
          _
        $region20: #{tpu_custom_call.1} parent=11 // pred_fallthru
          _
        // Predicated region
        $region21: #{tpu_custom_call.1} parent=11 // pred_check
          %p220 = pneg %p110
        $region22: #{tpu_custom_call.1} parent=11 // pred_check_branch
          %222 = sbr.rel (%p220) target = $region24
        $region23: #{tpu_custom_call.1} parent=11 // pred_region
          _
        $region24: #{tpu_custom_call.1} parent=11 // pred_fallthru
          _
        // Predicated region
        $region25: #{tpu_custom_call.1} parent=11 // pred_check
          %p223 = pneg %p131
        $region26: #{tpu_custom_call.1} parent=11 // pred_check_branch
          %225 = sbr.rel (%p223) target = $region28
        $region27: #{tpu_custom_call.1} parent=11 // pred_region
          _
        $region28: #{tpu_custom_call.1} parent=11 // pred_fallthru
          _
        // Predicated region
        $region29: #{tpu_custom_call.1} parent=11 // pred_check
          %p226 = pneg %p152
        $region30: #{tpu_custom_call.1} parent=11 // pred_check_branch
          %228 = sbr.rel (%p226) target = $region32
        $region31: #{tpu_custom_call.1} parent=11 // pred_region
          _
        $region32: #{tpu_custom_call.1} parent=11 // pred_fallthru
          _
        // Predicated region
        $region33: #{tpu_custom_call.1} parent=11 // pred_check
          %p229 = pneg %p173
        $region34: #{tpu_custom_call.1} parent=11 // pred_check_branch
          %231 = sbr.rel (%p229) target = $region36
        $region35: #{tpu_custom_call.1} parent=11 // pred_region
          _
        $region36: #{tpu_custom_call.1} parent=11 // pred_fallthru
          _
      $region12: #{tpu_custom_call.1} parent=5 // pred_fallthru
        _
      %p232 = scmp.lt.s32.totalorder %s21, 2
      // Predicated region
      $region37: #{tpu_custom_call.1} parent=5 // pred_check
        %p233 = pneg %p232
      $region38: #{tpu_custom_call.1} parent=5 // pred_check_branch
        %235 = sbr.rel (%p233) target = $region40
      $region39: #{tpu_custom_call.1} parent=5 // pred_region
        // Predicated region
        $region41: #{tpu_custom_call.1} parent=39 // pred_check
          %p236 = pneg %p41
        $region42: #{tpu_custom_call.1} parent=39 // pred_check_branch
          %238 = sbr.rel (%p236) target = $region44
        $region43: #{tpu_custom_call.1} parent=39 // pred_region
          %s239 = sand.u32 %s31, 1
          %s240 = scalar_lea.sflag [#allocation4], %s239
          %s241 = sand.u32 %s31, 1
          %s242 = smul.addr %s241, 64
          %s243 = scalar_lea.vmem [#allocation3], %s242
          %s245 = ssub.s32 1024, 1024
          %246 = vsyncadd %s240, %s245
          %s247 = smul.addr %s21, 8
          %s248 = smul.addr %s247, 128
          %s249 = scalar_lea.hbm %s0, %s248
          %s250 = sshll.u32 %s243, 4
          %s251 = int_to_ptr.vmem [resolvable:$true] %s250
          %256 = dma.hbm_to_vmem [thread:$0]  %s249, 1024, %s251, %s240, 128, 128, 8
        $region44: #{tpu_custom_call.1} parent=39 // pred_fallthru
          _
      $region40: #{tpu_custom_call.1} parent=5 // pred_fallthru
        _
      %p257 = scmp.le.s32.totalorder 1, %s21
      %p258 = scmp.lt.s32.totalorder %s21, 3
      %p259 = pnand %p257, %p258
      %p260 = pneg %p259
      // Predicated region
      $region45: #{tpu_custom_call.1} parent=5 // pred_check
        _
      $region46: #{tpu_custom_call.1} parent=5 // pred_check_branch
        %262 = sbr.rel (%p259) target = $region48
      $region47: #{tpu_custom_call.1} parent=5 // pred_region
        %s263 = ssub.s32 %s21, 1
        %s264 = sand.u32 %s34, 1
        %s265 = scalar_lea.sflag [#allocation4], %s264
        %s266 = sand.u32 %s34, 1
        %s267 = smul.addr %s266, 64
        %s268 = scalar_lea.vmem [#allocation3], %s267
        // Predicated region
        $region49: #{tpu_custom_call.1} parent=47 // pred_check
          %p269 = pneg %p47
        $region50: #{tpu_custom_call.1} parent=47 // pred_check_branch
          %271 = sbr.rel (%p269) target = $region52
        $region51: #{tpu_custom_call.1} parent=47 // pred_region
          %272 = dma.done %s265, 1024
        $region52: #{tpu_custom_call.1} parent=47 // pred_fallthru
          _
        %s273 = sand.u32 %s34, 1
        %s274 = scalar_lea.sflag [#allocation4], %s273
        %s275 = sand.u32 %s34, 1
        %s276 = smul.addr %s275, 64
        %s277 = scalar_lea.vmem [#allocation3], %s276
        %p278 = pneg %p47
        %p279 = pneg %p44
        %p280 = pneg %p68
        %p281 = pneg %p65
        %p282 = pneg %p89
        %p283 = pneg %p86
        %p284 = pneg %p110
        %p285 = pneg %p107
        %p286 = pneg %p131
        %p287 = pneg %p128
        %p288 = pneg %p152
        %p289 = pneg %p149
        %p290 = pneg %p173
        %p291 = pneg %p170
        %p292 = pneg %p199
        %p293 = pneg %p196
        %s294 = sand.u32 %s186, 1
        %s295 = scalar_lea.sflag [#allocation5], %s294
        %s296 = sand.u32 %s186, 1
        %s297 = smul.addr %s296, 64
        %s298 = scalar_lea.vmem [#allocation6], %s297
        %v299 = vld [vmem:[%s1] sm:$0x1]
        %v300 = vld [vmem:[#allocation2] sm:$0x1]
        %v301 = vld [vmem:[%s3] sm:$0xf]
        %v302 = vld [vmem:[%s4] sm:$0xf]
        %v303 = vld [vmem:[%s5] sm:$0xf]
        %v304 = vld [vmem:[%s6] sm:$0xf]
        %v305 = vld [vmem:[%s268] sm:$0xff]
        %v306 = vld [vmem:[%s268 + $0x8] sm:$0xff]
        %v307 = vld [vmem:[%s268 + $0x10] sm:$0xff]
        %v308 = vld [vmem:[%s268 + $0x18] sm:$0xff]
        %v309 = vld [vmem:[%s268 + $0x20] sm:$0xff]
        %v310 = vld [vmem:[%s268 + $0x28] sm:$0xff]
        %v311 = vld [vmem:[%s268 + $0x30] sm:$0xff]
        %v312 = vld [vmem:[%s268 + $0x38] sm:$0xff]
        %vm313 = vcmask 130048
        %v314 = vsel %vm313, %v305, 0.0
        %315 = vadd.xlane.f32.xlu0 %v314
        %v316 = vpop.xlane.xlu0 %315
        %v317 = vsel %vm313, %v306, 0.0
        %318 = vadd.xlane.f32.xlu0 %v317
        %v319 = vpop.xlane.xlu0 %318
        %v320 = vsel %vm313, %v307, 0.0
        %321 = vadd.xlane.f32.xlu0 %v320
        %v322 = vpop.xlane.xlu0 %321
        %v323 = vsel %vm313, %v308, 0.0
        %324 = vadd.xlane.f32.xlu0 %v323
        %v325 = vpop.xlane.xlu0 %324
        %v326 = vsel %vm313, %v309, 0.0
        %327 = vadd.xlane.f32.xlu0 %v326
        %v328 = vpop.xlane.xlu0 %327
        %v329 = vsel %vm313, %v310, 0.0
        %330 = vadd.xlane.f32.xlu0 %v329
        %v331 = vpop.xlane.xlu0 %330
        %v332 = vsel %vm313, %v311, 0.0
        %333 = vadd.xlane.f32.xlu0 %v332
        %v334 = vpop.xlane.xlu0 %333
        %v335 = vsel %vm313, %v312, 0.0
        %336 = vadd.xlane.f32.xlu0 %v335
        %v337 = vpop.xlane.xlu0 %336
        %v338 = vrcp.pop 16.0
        %v339 = vmul.f32 %v316, %v338
        %v340 = vmul.f32 %v319, %v338
        %v341 = vmul.f32 %v322, %v338
        %v342 = vmul.f32 %v325, %v338
        %v343 = vmul.f32 %v328, %v338
        %v344 = vmul.f32 %v331, %v338
        %v345 = vmul.f32 %v334, %v338
        %v346 = vmul.f32 %v337, %v338
        %v347 = vadd.f32 %v314, %v317
        %v348 = vrot.slane %v347, 4
        %v349 = vadd.f32 %v347, %v348
        %v350 = vrot.slane %v349, 2
        %v351 = vadd.f32 %v349, %v350
        %v352 = vrot.slane %v351, 1
        %v353 = vadd.f32 %v351, %v352
        %v354 = vadd.f32 %v320, %v323
        %v355 = vrot.slane %v354, 4
        %v356 = vadd.f32 %v354, %v355
        %v357 = vrot.slane %v356, 2
        %v358 = vadd.f32 %v356, %v357
        %v359 = vrot.slane %v358, 1
        %v360 = vadd.f32 %v358, %v359
        %v361 = vadd.f32 %v326, %v329
        %v362 = vrot.slane %v361, 4
        %v363 = vadd.f32 %v361, %v362
        %v364 = vrot.slane %v363, 2
        %v365 = vadd.f32 %v363, %v364
        %v366 = vrot.slane %v365, 1
        %v367 = vadd.f32 %v365, %v366
        %v368 = vadd.f32 %v332, %v335
        %v369 = vrot.slane %v368, 4
        %v370 = vadd.f32 %v368, %v369
        %v371 = vrot.slane %v370, 2
        %v372 = vadd.f32 %v370, %v371
        %v373 = vrot.slane %v372, 1
        %v374 = vadd.f32 %v372, %v373
        %v375 = vmul.f32 %v353, %v338
        %v376 = vmul.f32 %v360, %v338
        %v377 = vmul.f32 %v367, %v338
        %v378 = vmul.f32 %v374, %v338
        %380 = vset.pattern.permute.xlu0 0
        %381 = vperm.xlu0 %380, %v300
        %v382 = vpop.permute.xlu0 %381
        %v384 = vlaneseq
        %v385 = vshrl.u32 %v384, 7
        %v386 = vsub.s32 0, %v385
        %v387 = vrot.slane %v382, %v386
        %v396 = vlaneseq
        %v397 = vand.u32 %v396, 127
        %v398 = vlaneseq
        %v399 = vshrl.u32 %v398, 7
        %v400 = vsub.s32 %v397, %v399
        %v401 = vrot.slane %v339, %v400
        %v402 = vadd.s32 %v397, 4294967288
        %v403 = vlaneseq
        %v404 = vshrl.u32 %v403, 7
        %v405 = vsub.s32 %v402, %v404
        %v406 = vrot.slane %v340, %v405
        %vm407 = vcmask 130112
        %v408 = vsel %vm407, %v406, %v401
        %v409 = vlaneseq
        %v410 = vshrl.u32 %v409, 7
        %v411 = vsub.s32 %v397, %v410
        %v412 = vrot.slane %v341, %v411
        %v413 = vlaneseq
        %v414 = vshrl.u32 %v413, 7
        %v415 = vsub.s32 %v402, %v414
        %v416 = vrot.slane %v342, %v415
        %v417 = vsel %vm407, %v416, %v412
        %v418 = vlaneseq
        %v419 = vshrl.u32 %v418, 7
        %v420 = vsub.s32 %v397, %v419
        %v421 = vrot.slane %v343, %v420
        %v422 = vlaneseq
        %v423 = vshrl.u32 %v422, 7
        %v424 = vsub.s32 %v402, %v423
        %v425 = vrot.slane %v344, %v424
        %v426 = vsel %vm407, %v425, %v421
        %v427 = vlaneseq
        %v428 = vshrl.u32 %v427, 7
        %v429 = vsub.s32 %v397, %v428
        %v430 = vrot.slane %v345, %v429
        %v431 = vlaneseq
        %v432 = vshrl.u32 %v431, 7
        %v433 = vsub.s32 %v402, %v432
        %v434 = vrot.slane %v346, %v433
        %v435 = vsel %vm407, %v434, %v430
        %vm436 = vcmask 1041409
        %v437 = vsel %vm436, %v417, %v408
        %vm438 = vcmask 1042434
        %v439 = vsel %vm438, %v426, %v437
        %vm440 = vcmask 1043459
        %v441 = vsel %vm440, %v435, %v439
        %vm442 = vcmask 31744
        %v444 = vsel %vm442, %v299, 0
        %vm446 = vcmask 1043456
        %v447 = vsel %vm446, %v441, 0
        %449 = vmatprep.subr.mxu0 0.0
        %450 = vmatpush1.msra.mxu0 %v447
        %451 = vmatprep.subr.mxu0 0.0
        %452 = vmatpush1.msra.mxu0 0.0
        %453 = vmatprep.subr.mxu0 0.0
        %454 = vmatpush1.msra.mxu0 0.0
        %455 = vmatprep.subr.mxu0 0.0
        %456 = vmatpush1.msra.mxu0 0.0
        %457 = vmatprep.subr.mxu0 0.0
        %458 = vmatpush1.msra.mxu0 0.0
        %459 = vmatprep.subr.mxu0 0.0
        %460 = vmatpush1.msra.mxu0 0.0
        %461 = vmatprep.subr.mxu0 0.0
        %462 = vmatpush1.msra.mxu0 0.0
        %463 = vmatprep.subr.mxu0 0.0
        %464 = vmatpush1.msra.mxu0 0.0
        %465 = vmatprep.subr.mxu0 0.0
        %466 = vmatpush1.msra.mxu0 0.0
        %467 = vmatprep.subr.mxu0 0.0
        %468 = vmatpush1.msra.mxu0 0.0
        %469 = vmatprep.subr.mxu0 0.0
        %470 = vmatpush1.msra.mxu0 0.0
        %471 = vmatprep.subr.mxu0 0.0
        %472 = vmatpush1.msra.mxu0 0.0
        %473 = vmatprep.subr.mxu0 0.0
        %474 = vmatpush1.msra.mxu0 0.0
        %475 = vmatprep.subr.mxu0 0.0
        %476 = vmatpush1.msra.mxu0 0.0
        %477 = vmatprep.subr.mxu0 0.0
        %478 = vmatpush1.msra.mxu0 0.0
        %479 = vmatprep.subr.mxu0 0.0
        %480 = vmatpush1.msra.mxu0 0.0
        %481 = vmatprep.subr.mxu0 0.0
        %482 = vmatpush1.msra.mxu0 0.0
        %483 = vmatprep.subr.mxu0 0.0
        %484 = vmatpush1.msra.mxu0 0.0
        %485 = vmatprep.subr.mxu0 0.0
        %486 = vmatpush1.msra.mxu0 0.0
        %487 = vmatprep.subr.mxu0 0.0
        %488 = vmatpush1.msra.mxu0 0.0
        %489 = vmatprep.subr.mxu0 0.0
        %490 = vmatpush1.msra.mxu0 0.0
        %491 = vmatprep.subr.mxu0 0.0
        %492 = vmatpush1.msra.mxu0 0.0
        %493 = vmatprep.subr.mxu0 0.0
        %494 = vmatpush1.msra.mxu0 0.0
        %495 = vmatprep.subr.mxu0 0.0
        %496 = vmatpush1.msra.mxu0 0.0
        %497 = vmatprep.subr.mxu0 0.0
        %498 = vmatpush1.msra.mxu0 0.0
        %499 = vmatprep.subr.mxu0 0.0
        %500 = vmatpush1.msra.mxu0 0.0
        %501 = vmatprep.subr.mxu0 0.0
        %502 = vmatpush1.msra.mxu0 0.0
        %503 = vmatprep.subr.mxu0 0.0
        %504 = vmatpush1.msra.mxu0 0.0
        %505 = vmatprep.subr.mxu0 0.0
        %506 = vmatpush1.msra.mxu0 0.0
        %507 = vmatprep.subr.mxu0 0.0
        %508 = vmatpush1.msra.mxu0 0.0
        %509 = vmatprep.subr.mxu0 0.0
        %510 = vmatpush1.msra.mxu0 0.0
        %511 = vmatprep.subr.mxu0 0.0
        %512 = vmatpush1.msra.mxu0 0.0
        %513 = vmatprep.mubr.f32.mxu0 0.0
        %514 = vmatmul.mubr.f32.gmra.mrb[0].mxu0 %v444
        %v515 = vpop.f32.mrb[0].mxu0
        %v516 = vadd.f32 %v387, %v515
        %v517 = vpop.f32.mrb[0].mxu0
        %518 = vdwg.mxu0
        %v519 = vmax.f32 %v516, 0.0
        %v524 = vsel %vm436, %v376, %v375
        %v525 = vsel %vm438, %v377, %v524
        %v526 = vsel %vm440, %v378, %v525
        %v527 = vsel %vm446, %v526, 0
        %529 = vmatprep.subr.mxu0 0.0
        %530 = vmatpush1.msra.mxu0 %v527
        %531 = vmatprep.subr.mxu0 0.0
        %532 = vmatpush1.msra.mxu0 0.0
        %533 = vmatprep.subr.mxu0 0.0
        %534 = vmatpush1.msra.mxu0 0.0
        %535 = vmatprep.subr.mxu0 0.0
        %536 = vmatpush1.msra.mxu0 0.0
        %537 = vmatprep.subr.mxu0 0.0
        %538 = vmatpush1.msra.mxu0 0.0
        %539 = vmatprep.subr.mxu0 0.0
        %540 = vmatpush1.msra.mxu0 0.0
        %541 = vmatprep.subr.mxu0 0.0
        %542 = vmatpush1.msra.mxu0 0.0
        %543 = vmatprep.subr.mxu0 0.0
        %544 = vmatpush1.msra.mxu0 0.0
        %545 = vmatprep.subr.mxu0 0.0
        %546 = vmatpush1.msra.mxu0 0.0
        %547 = vmatprep.subr.mxu0 0.0
        %548 = vmatpush1.msra.mxu0 0.0
        %549 = vmatprep.subr.mxu0 0.0
        %550 = vmatpush1.msra.mxu0 0.0
        %551 = vmatprep.subr.mxu0 0.0
        %552 = vmatpush1.msra.mxu0 0.0
        %553 = vmatprep.subr.mxu0 0.0
        %554 = vmatpush1.msra.mxu0 0.0
        %555 = vmatprep.subr.mxu0 0.0
        %556 = vmatpush1.msra.mxu0 0.0
        %557 = vmatprep.subr.mxu0 0.0
        %558 = vmatpush1.msra.mxu0 0.0
        %559 = vmatprep.subr.mxu0 0.0
        %560 = vmatpush1.msra.mxu0 0.0
        %561 = vmatprep.subr.mxu0 0.0
        %562 = vmatpush1.msra.mxu0 0.0
        %563 = vmatprep.subr.mxu0 0.0
        %564 = vmatpush1.msra.mxu0 0.0
        %565 = vmatprep.subr.mxu0 0.0
        %566 = vmatpush1.msra.mxu0 0.0
        %567 = vmatprep.subr.mxu0 0.0
        %568 = vmatpush1.msra.mxu0 0.0
        %569 = vmatprep.subr.mxu0 0.0
        %570 = vmatpush1.msra.mxu0 0.0
        %571 = vmatprep.subr.mxu0 0.0
        %572 = vmatpush1.msra.mxu0 0.0
        %573 = vmatprep.subr.mxu0 0.0
        %574 = vmatpush1.msra.mxu0 0.0
        %575 = vmatprep.subr.mxu0 0.0
        %576 = vmatpush1.msra.mxu0 0.0
        %577 = vmatprep.subr.mxu0 0.0
        %578 = vmatpush1.msra.mxu0 0.0
        %579 = vmatprep.subr.mxu0 0.0
        %580 = vmatpush1.msra.mxu0 0.0
        %581 = vmatprep.subr.mxu0 0.0
        %582 = vmatpush1.msra.mxu0 0.0
        %583 = vmatprep.subr.mxu0 0.0
        %584 = vmatpush1.msra.mxu0 0.0
        %585 = vmatprep.subr.mxu0 0.0
        %586 = vmatpush1.msra.mxu0 0.0
        %587 = vmatprep.subr.mxu0 0.0
        %588 = vmatpush1.msra.mxu0 0.0
        %589 = vmatprep.subr.mxu0 0.0
        %590 = vmatpush1.msra.mxu0 0.0
        %591 = vmatprep.subr.mxu0 0.0
        %592 = vmatpush1.msra.mxu0 0.0
        %593 = vmatprep.mubr.f32.mxu0 0.0
        %594 = vmatmul.mubr.f32.gmra.mrb[0].mxu0 %v444
        %v595 = vpop.f32.mrb[0].mxu0
        %v596 = vadd.f32 %v387, %v595
        %v597 = vpop.f32.mrb[0].mxu0
        %598 = vdwg.mxu0
        %v599 = vmax.f32 %v596, 0.0
        %601 = vset.pattern.permute.xlu0 0
        %602 = vperm.xlu0 %601, %v302
        %v603 = vpop.permute.xlu0 %602
        %vm605 = vcmask 7168
        %v607 = vsel %vm605, %v301, 0
        %vm609 = vcmask 1040384
        %v611 = vsel %vm609, %v519, 0
        %613 = vmatprep.subr.mxu0 0.0
        %614 = vmatpush1.msra.mxu0 %v611
        %615 = vmatprep.subr.mxu0 0.0
        %616 = vmatpush1.msra.mxu0 0.0
        %617 = vmatprep.subr.mxu0 0.0
        %618 = vmatpush1.msra.mxu0 0.0
        %619 = vmatprep.subr.mxu0 0.0
        %620 = vmatpush1.msra.mxu0 0.0
        %621 = vmatprep.subr.mxu0 0.0
        %622 = vmatpush1.msra.mxu0 0.0
        %623 = vmatprep.subr.mxu0 0.0
        %624 = vmatpush1.msra.mxu0 0.0
        %625 = vmatprep.subr.mxu0 0.0
        %626 = vmatpush1.msra.mxu0 0.0
        %627 = vmatprep.subr.mxu0 0.0
        %628 = vmatpush1.msra.mxu0 0.0
        %629 = vmatprep.subr.mxu0 0.0
        %630 = vmatpush1.msra.mxu0 0.0
        %631 = vmatprep.subr.mxu0 0.0
        %632 = vmatpush1.msra.mxu0 0.0
        %633 = vmatprep.subr.mxu0 0.0
        %634 = vmatpush1.msra.mxu0 0.0
        %635 = vmatprep.subr.mxu0 0.0
        %636 = vmatpush1.msra.mxu0 0.0
        %637 = vmatprep.subr.mxu0 0.0
        %638 = vmatpush1.msra.mxu0 0.0
        %639 = vmatprep.subr.mxu0 0.0
        %640 = vmatpush1.msra.mxu0 0.0
        %641 = vmatprep.subr.mxu0 0.0
        %642 = vmatpush1.msra.mxu0 0.0
        %643 = vmatprep.subr.mxu0 0.0
        %644 = vmatpush1.msra.mxu0 0.0
        %645 = vmatprep.subr.mxu0 0.0
        %646 = vmatpush1.msra.mxu0 0.0
        %647 = vmatprep.subr.mxu0 0.0
        %648 = vmatpush1.msra.mxu0 0.0
        %649 = vmatprep.subr.mxu0 0.0
        %650 = vmatpush1.msra.mxu0 0.0
        %651 = vmatprep.subr.mxu0 0.0
        %652 = vmatpush1.msra.mxu0 0.0
        %653 = vmatprep.subr.mxu0 0.0
        %654 = vmatpush1.msra.mxu0 0.0
        %655 = vmatprep.subr.mxu0 0.0
        %656 = vmatpush1.msra.mxu0 0.0
        %657 = vmatprep.subr.mxu0 0.0
        %658 = vmatpush1.msra.mxu0 0.0
        %659 = vmatprep.subr.mxu0 0.0
        %660 = vmatpush1.msra.mxu0 0.0
        %661 = vmatprep.subr.mxu0 0.0
        %662 = vmatpush1.msra.mxu0 0.0
        %663 = vmatprep.subr.mxu0 0.0
        %664 = vmatpush1.msra.mxu0 0.0
        %665 = vmatprep.subr.mxu0 0.0
        %666 = vmatpush1.msra.mxu0 0.0
        %667 = vmatprep.subr.mxu0 0.0
        %668 = vmatpush1.msra.mxu0 0.0
        %669 = vmatprep.subr.mxu0 0.0
        %670 = vmatpush1.msra.mxu0 0.0
        %671 = vmatprep.subr.mxu0 0.0
        %672 = vmatpush1.msra.mxu0 0.0
        %673 = vmatprep.subr.mxu0 0.0
        %674 = vmatpush1.msra.mxu0 0.0
        %675 = vmatprep.subr.mxu0 0.0
        %676 = vmatpush1.msra.mxu0 0.0
        %677 = vmatprep.mubr.f32.mxu0 0.0
        %678 = vmatmul.mubr.f32.gmra.mrb[0].mxu0 %v607
        %v679 = vpop.f32.mrb[0].mxu0
        %v680 = vadd.f32 %v603, %v679
        %v681 = vpop.f32.mrb[0].mxu0
        %682 = vdwg.mxu0
        %v683 = vxor.u32 %v680, 2147483648
        %v684 = vmul.f32 %v683, 1.442695
        %v685 = vpow.pop %v684
        %v686 = vadd.f32 %v685, 1.0
        %v687 = vrcp.pop %v686
        %v688 = vmul.f32 1.0, %v687
        %690 = vset.pattern.permute.xlu0 0
        %691 = vperm.xlu0 %690, %v304
        %v692 = vpop.permute.xlu0 %691
        %v695 = vsel %vm605, %v303, 0
        %v698 = vsel %vm609, %v599, 0
        %700 = vmatprep.subr.mxu0 0.0
        %701 = vmatpush1.msra.mxu0 %v698
        %702 = vmatprep.subr.mxu0 0.0
        %703 = vmatpush1.msra.mxu0 0.0
        %704 = vmatprep.subr.mxu0 0.0
        %705 = vmatpush1.msra.mxu0 0.0
        %706 = vmatprep.subr.mxu0 0.0
        %707 = vmatpush1.msra.mxu0 0.0
        %708 = vmatprep.subr.mxu0 0.0
        %709 = vmatpush1.msra.mxu0 0.0
        %710 = vmatprep.subr.mxu0 0.0
        %711 = vmatpush1.msra.mxu0 0.0
        %712 = vmatprep.subr.mxu0 0.0
        %713 = vmatpush1.msra.mxu0 0.0
        %714 = vmatprep.subr.mxu0 0.0
        %715 = vmatpush1.msra.mxu0 0.0
        %716 = vmatprep.subr.mxu0 0.0
        %717 = vmatpush1.msra.mxu0 0.0
        %718 = vmatprep.subr.mxu0 0.0
        %719 = vmatpush1.msra.mxu0 0.0
        %720 = vmatprep.subr.mxu0 0.0
        %721 = vmatpush1.msra.mxu0 0.0
        %722 = vmatprep.subr.mxu0 0.0
        %723 = vmatpush1.msra.mxu0 0.0
        %724 = vmatprep.subr.mxu0 0.0
        %725 = vmatpush1.msra.mxu0 0.0
        %726 = vmatprep.subr.mxu0 0.0
        %727 = vmatpush1.msra.mxu0 0.0
        %728 = vmatprep.subr.mxu0 0.0
        %729 = vmatpush1.msra.mxu0 0.0
        %730 = vmatprep.subr.mxu0 0.0
        %731 = vmatpush1.msra.mxu0 0.0
        %732 = vmatprep.subr.mxu0 0.0
        %733 = vmatpush1.msra.mxu0 0.0
        %734 = vmatprep.subr.mxu0 0.0
        %735 = vmatpush1.msra.mxu0 0.0
        %736 = vmatprep.subr.mxu0 0.0
        %737 = vmatpush1.msra.mxu0 0.0
        %738 = vmatprep.subr.mxu0 0.0
        %739 = vmatpush1.msra.mxu0 0.0
        %740 = vmatprep.subr.mxu0 0.0
        %741 = vmatpush1.msra.mxu0 0.0
        %742 = vmatprep.subr.mxu0 0.0
        %743 = vmatpush1.msra.mxu0 0.0
        %744 = vmatprep.subr.mxu0 0.0
        %745 = vmatpush1.msra.mxu0 0.0
        %746 = vmatprep.subr.mxu0 0.0
        %747 = vmatpush1.msra.mxu0 0.0
        %748 = vmatprep.subr.mxu0 0.0
        %749 = vmatpush1.msra.mxu0 0.0
        %750 = vmatprep.subr.mxu0 0.0
        %751 = vmatpush1.msra.mxu0 0.0
        %752 = vmatprep.subr.mxu0 0.0
        %753 = vmatpush1.msra.mxu0 0.0
        %754 = vmatprep.subr.mxu0 0.0
        %755 = vmatpush1.msra.mxu0 0.0
        %756 = vmatprep.subr.mxu0 0.0
        %757 = vmatpush1.msra.mxu0 0.0
        %758 = vmatprep.subr.mxu0 0.0
        %759 = vmatpush1.msra.mxu0 0.0
        %760 = vmatprep.subr.mxu0 0.0
        %761 = vmatpush1.msra.mxu0 0.0
        %762 = vmatprep.subr.mxu0 0.0
        %763 = vmatpush1.msra.mxu0 0.0
        %764 = vmatprep.mubr.f32.mxu0 0.0
        %765 = vmatmul.mubr.f32.gmra.mrb[0].mxu0 %v695
        %v766 = vpop.f32.mrb[0].mxu0
        %v767 = vadd.f32 %v692, %v766
        %v768 = vpop.f32.mrb[0].mxu0
        %769 = vdwg.mxu0
        %v770 = vxor.u32 %v767, 2147483648
        %v771 = vmul.f32 %v770, 1.442695
        %v772 = vpow.pop %v771
        %v773 = vadd.f32 %v772, 1.0
        %v774 = vrcp.pop %v773
        %v775 = vmul.f32 1.0, %v774
        %v776 = vlaneseq
        %v777 = vshrl.u32 %v776, 7
        %v778 = vsub.s32 0, %v777
        %v779 = vrot.slane %v688, %v778
        %781 = vbcast.lane.b32.xlu0 %v779, 256
        %v782 = vpop.permute.xlu0 %781
        %s784 = sor.u32 256, 8
        %785 = vbcast.lane.b32.xlu0 %v779, %s784
        %v786 = vpop.permute.xlu0 %785
        %v787 = vlaneseq
        %v788 = vshrl.u32 %v787, 7
        %v789 = vsub.s32 1, %v788
        %v790 = vrot.slane %v688, %v789
        %792 = vbcast.lane.b32.xlu0 %v790, 256
        %v793 = vpop.permute.xlu0 %792
        %s795 = sor.u32 256, 8
        %796 = vbcast.lane.b32.xlu0 %v790, %s795
        %v797 = vpop.permute.xlu0 %796
        %v798 = vlaneseq
        %v799 = vshrl.u32 %v798, 7
        %v800 = vsub.s32 2, %v799
        %v801 = vrot.slane %v688, %v800
        %803 = vbcast.lane.b32.xlu0 %v801, 256
        %v804 = vpop.permute.xlu0 %803
        %s806 = sor.u32 256, 8
        %807 = vbcast.lane.b32.xlu0 %v801, %s806
        %v808 = vpop.permute.xlu0 %807
        %v809 = vlaneseq
        %v810 = vshrl.u32 %v809, 7
        %v811 = vsub.s32 3, %v810
        %v812 = vrot.slane %v688, %v811
        %814 = vbcast.lane.b32.xlu0 %v812, 256
        %v815 = vpop.permute.xlu0 %814
        %s817 = sor.u32 256, 8
        %818 = vbcast.lane.b32.xlu0 %v812, %s817
        %v819 = vpop.permute.xlu0 %818
        %v822 = vunpack.c.l.s4 1966171168
        %v823 = vunpack.c.0.s8 %v822
        %v824 = vlaneseq
        %v825 = vshrl.u32 %v824, 7
        %v826 = vsub.s32 %v823, %v825
        %v827 = vrot.slane %v775, %v826
        %v828 = vcombine.high %v827, %v827
        %v830 = vunpack.c.l.s4 1966171168
        %v831 = vunpack.c.0.s8 %v830
        %v832 = vlaneseq
        %v833 = vshrl.u32 %v832, 7
        %v834 = vsub.s32 %v831, %v833
        %v835 = vrot.slane %v827, %v834
        %v837 = vunpack.c.l.s4 1966171168
        %v838 = vunpack.c.0.s8 %v837
        %v839 = vlaneseq
        %v840 = vshrl.u32 %v839, 7
        %v841 = vsub.s32 %v838, %v840
        %v842 = vrot.slane %v828, %v841
        %v843 = vcombine.high %v835, %v835
        %v844 = vcombine.high %v842, %v842
        %v845 = vmul.f32 %v305, %v782
        %v846 = vmul.f32 %v306, %v786
        %v847 = vmul.f32 %v307, %v793
        %v848 = vmul.f32 %v308, %v797
        %v849 = vmul.f32 %v309, %v804
        %v850 = vmul.f32 %v310, %v808
        %v851 = vmul.f32 %v311, %v815
        %v852 = vmul.f32 %v312, %v819
        %v853 = vlaneseq
        %v854 = vshrl.u32 %v853, 7
        %v855 = vsub.s32 0, %v854
        %v856 = vrot.slane %v835, %v855
        %v857 = vlaneseq
        %v858 = vshrl.u32 %v857, 7
        %v859 = vsub.s32 0, %v858
        %v860 = vrot.slane %v842, %v859
        %v861 = vlaneseq
        %v862 = vshrl.u32 %v861, 7
        %v863 = vsub.s32 0, %v862
        %v864 = vrot.slane %v843, %v863
        %v865 = vlaneseq
        %v866 = vshrl.u32 %v865, 7
        %v867 = vsub.s32 0, %v866
        %v868 = vrot.slane %v844, %v867
        %v873 = vmul.f32 %v845, %v856
        %v874 = vmul.f32 %v846, %v856
        %v875 = vmul.f32 %v847, %v860
        %v876 = vmul.f32 %v848, %v860
        %v877 = vmul.f32 %v849, %v864
        %v878 = vmul.f32 %v850, %v864
        %v879 = vmul.f32 %v851, %v868
        %v880 = vmul.f32 %v852, %v868
        %881 = vst.msk [vmem:[%s298] sm:$0xff] %vm313, %v873
        %882 = vst.msk [vmem:[%s298 + $0x8] sm:$0xff] %vm313, %v874
        %883 = vst.msk [vmem:[%s298 + $0x10] sm:$0xff] %vm313, %v875
        %884 = vst.msk [vmem:[%s298 + $0x18] sm:$0xff] %vm313, %v876
        %885 = vst.msk [vmem:[%s298 + $0x20] sm:$0xff] %vm313, %v877
        %886 = vst.msk [vmem:[%s298 + $0x28] sm:$0xff] %vm313, %v878
        %887 = vst.msk [vmem:[%s298 + $0x30] sm:$0xff] %vm313, %v879
        %888 = vst.msk [vmem:[%s298 + $0x38] sm:$0xff] %vm313, %v880
        %s889 = sand.u32 %s186, 1
        %s890 = scalar_lea.sflag [#allocation5], %s889
        %s891 = sand.u32 %s186, 1
        %s892 = smul.addr %s891, 64
        %s893 = scalar_lea.vmem [#allocation6], %s892
        // Predicated region
        $region53: #{tpu_custom_call.1} parent=47 // pred_check
          %p894 = pneg %p196
        $region54: #{tpu_custom_call.1} parent=47 // pred_check_branch
          %896 = sbr.rel (%p894) target = $region56
        $region55: #{tpu_custom_call.1} parent=47 // pred_region
          %s898 = ssub.s32 1024, 1024
          %899 = vsyncadd %s890, %s898
          %s900 = smul.addr %s26, 8
          %s901 = smul.addr %s900, 128
          %s902 = scalar_lea.hbm %s7, %s901
          %s903 = sshll.u32 %s893, 4
          %s904 = int_to_ptr.vmem [resolvable:$true] %s903
          %909 = dma.vmem_to_hbm [thread:$0]  %s904, 1024, %s902, %s890, 128, 128, 8
        $region56: #{tpu_custom_call.1} parent=47 // pred_fallthru
          _
      $region48: #{tpu_custom_call.1} parent=5 // pred_fallthru
        _
      %p910 = scmp.le.s32.totalorder 2, %s21
      // Predicated region
      $region57: #{tpu_custom_call.1} parent=5 // pred_check
        %p911 = pneg %p910
      $region58: #{tpu_custom_call.1} parent=5 // pred_check_branch
        %913 = sbr.rel (%p911) target = $region60
      $region59: #{tpu_custom_call.1} parent=5 // pred_region
        %s914 = ssub.s32 %s21, 2
        // Predicated region
        $region61: #{tpu_custom_call.1} parent=59 // pred_check
          %p915 = pneg %p202
        $region62: #{tpu_custom_call.1} parent=59 // pred_check_branch
          %917 = sbr.rel (%p915) target = $region64
        $region63: #{tpu_custom_call.1} parent=59 // pred_region
          %s918 = sand.u32 %s187, 1
          %s919 = scalar_lea.sflag [#allocation5], %s918
          %s920 = sand.u32 %s187, 1
          %s921 = smul.addr %s920, 64
          %s922 = scalar_lea.vmem [#allocation6], %s921
          %923 = dma.done %s919, 1024
        $region64: #{tpu_custom_call.1} parent=59 // pred_fallthru
          _
      $region60: #{tpu_custom_call.1} parent=5 // pred_fallthru
        _
    $region6: #{tpu_custom_call.1} parent=1 // loop_footer
      %s25 = sadd.s32 1, %s21
    $region7: #{tpu_custom_call.1} parent=1 // loop_footer_branch
      %20 = sbr.rel target = $region3
    $region8: #{tpu_custom_call.1} parent=1 // loop_exit
      _
    %924 = vsyncpa [#allocation4], 1
    %s925 = scalar_lea.sflag [#allocation4], 1
    %926 = vsyncpa %s925, 1
    %927 = vsyncpa [#allocation5], 1
    %s928 = scalar_lea.sflag [#allocation5], 1
    %929 = vsyncpa %s928, 1

</llo_original>
